<compile_context>
chip_gen: v7x
topology: tpu7x:2x2x1
jax: 0.10.0
libtpu: 0.0.40
codegen_flags: <defaults>
</compile_context>

<pallas_src>
import functools

import jax
import jax.numpy as jnp
from jax.experimental import pallas as pl
from jax.experimental.pallas import tpu as pltpu

_LANES = 128
_SUBLANES = 8


def _round_up(x, m):
    return ((x + m - 1) // m) * m


# --------------------------------------------------------------------------- #
# Kernel
# --------------------------------------------------------------------------- #
def _multihead_kernel(x_ref, wb_ref, bb_ref, wh_ref, bh_ref, out_ref):
    # Backbone: feat = relu(x @ Wb + bb)   (bf16 MXU inputs, f32 accumulation)
    feat = jnp.dot(x_ref[...], wb_ref[...], preferred_element_type=jnp.float32)
    feat = jnp.maximum(feat + bb_ref[...], 0.0)

    # All heads fused: (tb, F) @ (F, HO_pad) + (1, HO_pad)  -> lane-dense tile.
    y = jnp.dot(feat.astype(wh_ref.dtype), wh_ref[...],
                preferred_element_type=jnp.float32)
    out_ref[...] = (y + bh_ref[...]).astype(out_ref.dtype)


# --------------------------------------------------------------------------- #
# Tiling / VMEM helpers
# --------------------------------------------------------------------------- #
def _pick_tile_b(B, bytes_per_row, vmem_tile_budget=8 * 1024 * 1024):
    """Largest batch tile (multiple of 8, <= 1024) that fits the tile budget,
    preferring >= 2 grid steps so 'parallel' can use both TCs on v7x."""
    b8 = _round_up(max(B, 1), _SUBLANES)
    tb = _SUBLANES
    for t in (1024, 512, 256, 128, 64, 32, 16, 8):
        if t <= b8 and 2 * t * bytes_per_row <= vmem_tile_budget:
            tb = t
            break
    while tb > _SUBLANES and _round_up(b8, tb) // tb < 2:
        tb //= 2
    return tb


def _vmem_limit_bytes(needed_bytes):
    """Leave the compiler default unless the resident blocks demand more; cap
    at ~75% of the physical per-core VMEM (generation-aware: 64 MiB on v7x,
    128 MiB on v5e/v6e)."""
    default_scoped = 32 * 1024 * 1024
    if needed_bytes <= default_scoped // 2:
        return None
    try:
        cap = pltpu.get_tpu_info().vmem_capacity_bytes
    except Exception:
        cap = 64 * 1024 * 1024  # conservative: v7x per-TC capacity
    return int(min(0.75 * cap, max(2 * needed_bytes, default_scoped)))


# --------------------------------------------------------------------------- #
# pallas_call wrapper
# --------------------------------------------------------------------------- #
def _multihead_fused(x_pad, wb, bb2, wh_all, bh_all, *, tb, out_dtype):
    """x_pad: (B_pad, d_in); wb: (d_in, F); bb2: (1, F); wh_all: (F, HO_pad);
    bh_all: (1, HO_pad).  Returns (B_pad, HO_pad) in out_dtype."""
    B_pad, d_in = x_pad.shape
    F, HO_pad = wh_all.shape
    grid = B_pad // tb

    resident = pl.Buffered(1)  # grid-invariant blocks: single-buffered
    in_specs = [
        pl.BlockSpec((tb, d_in), lambda i: (i, 0)),                             # x tile
        pl.BlockSpec((d_in, F), lambda i: (0, 0), pipeline_mode=resident),      # Wb
        pl.BlockSpec((1, F), lambda i: (0, 0), pipeline_mode=resident),         # bb
        pl.BlockSpec((F, HO_pad), lambda i: (0, 0), pipeline_mode=resident),    # Wh_all
        pl.BlockSpec((1, HO_pad), lambda i: (0, 0), pipeline_mode=resident),    # bh_all
    ]
    out_specs = pl.BlockSpec((tb, HO_pad), lambda i: (i, 0))

    def _nbytes(a):
        return a.size * a.dtype.itemsize

    out_itemsize = jnp.dtype(out_dtype).itemsize
    cost = pl.CostEstimate(
        flops=2 * B_pad * (d_in * F + F * HO_pad),
        transcendentals=0,
        bytes_accessed=(_nbytes(x_pad) + _nbytes(wb) + _nbytes(bb2)
                        + _nbytes(wh_all) + _nbytes(bh_all)
                        + B_pad * HO_pad * out_itemsize),
    )

    # Resident weights (single-buffered) + streamed x / out tiles (double-buffered).
    needed = (_nbytes(wb) + _nbytes(bb2) + _nbytes(wh_all) + _nbytes(bh_all)
              + 2 * tb * d_in * x_pad.dtype.itemsize
              + 2 * tb * HO_pad * out_itemsize)

    return pl.pallas_call(
        _multihead_kernel,
        out_shape=jax.ShapeDtypeStruct((B_pad, HO_pad), out_dtype),
        grid_spec=pltpu.PrefetchScalarGridSpec(
            num_scalar_prefetch=0,
            grid=(grid,),
            in_specs=in_specs,
            out_specs=out_specs,
        ),
        compiler_params=pltpu.CompilerParams(
            dimension_semantics=("parallel",),       # independent batch tiles
            vmem_limit_bytes=_vmem_limit_bytes(needed),
        ),
        cost_estimate=cost,
    )(x_pad, wb, bb2, wh_all, bh_all)


# --------------------------------------------------------------------------- #
# Weight packing (hoistable out of the hot path) + forward
# --------------------------------------------------------------------------- #
def pack_params(wb, bb, wh, bh, *, compute_dtype=jnp.bfloat16):
    """Pack + lane-pad the weights.  Wh_all[:, h*O:(h+1)*O] == wh[h]; the head
    axis is zero-padded up to a 128-lane multiple (unmasked output stores)."""
    H, F, O = wh.shape
    HO = H * O
    HO_pad = max(_round_up(HO, _LANES), _LANES)
    wh_all = jnp.transpose(wh, (1, 0, 2)).reshape(F, HO)
    wh_all = jnp.pad(wh_all, ((0, 0), (0, HO_pad - HO))).astype(compute_dtype)
    bh_all = jnp.pad(bh.reshape(1, HO), ((0, 0), (0, HO_pad - HO))).astype(jnp.float32)
    bb2 = bb.reshape(1, -1).astype(jnp.float32)
    return wb.astype(compute_dtype), bb2, wh_all, bh_all


def _mxu_scale(B, d_in, F, HO):
    # Tiny problems are overhead-bound in any custom kernel; use plain XLA there.
    return B >= 128 and F >= 64 and HO >= 128


@functools.partial(jax.jit, static_argnames=("out_dtype", "impl", "compute_dtype"))
def multihead_forward(x, wb, bb, wh, bh, *, out_dtype=jnp.float32,
                      impl="auto", compute_dtype=jnp.bfloat16):
    """x: (B, d_in); wb: (d_in, F); bb: (F,); wh: (H, F, O); bh: (H, O).
    Returns a tuple of H arrays of shape (B, O), matching
    `[head(module(x)) for head in self.heads]`."""
    H, F, O = wh.shape
    B, d_in = x.shape
    HO = H * O

    if impl == "xla" or (impl == "auto" and not _mxu_scale(B, d_in, F, HO)):
        # Shape-gated fallback: for tiny shapes a fused XLA dot beats any pallas_call.
        feat = jnp.maximum(x.astype(jnp.float32) @ wb.astype(jnp.float32) + bb, 0.0)
        outs = jnp.einsum("bf,hfo->bho", feat, wh.astype(jnp.float32)) + bh[None]
        return tuple(outs[:, h].astype(out_dtype) for h in range(H))

    # Pallas path: pack weights (fuses under this jit; callers doing repeated
    # inference can also call pack_params() once and reuse the result).
    wbp, bb2, wh_all, bh_all = pack_params(wb, bb, wh, bh, compute_dtype=compute_dtype)
    HO_pad = wh_all.shape[1]

    bytes_per_row = d_in * jnp.dtype(compute_dtype).itemsize + HO_pad * jnp.dtype(out_dtype).itemsize
    tb = _pick_tile_b(B, bytes_per_row)
    B_pad = _round_up(B, tb)
    x_pad = jnp.pad(x.astype(compute_dtype), ((0, B_pad - B), (0, 0)))

    out = _multihead_fused(x_pad, wbp, bb2, wh_all, bh_all, tb=tb, out_dtype=out_dtype)
    out = out[:B, :HO]                       # drop batch + lane padding (fused under jit)
    return tuple(out[:, h * O:(h + 1) * O] for h in range(H))

# TODO(synk): if F*HO_pad in bf16 ever exceeds ~20 MiB (v7x budget), add a second
# grid axis tiling HO_pad in 128-lane chunks with the backbone feat cached in VMEM scratch.


# --------------------------------------------------------------------------- #
# Reference (mirrors the kernel's bf16 input rounding, f32 math)
# --------------------------------------------------------------------------- #
def _reference(x, wb, bb, wh, bh, compute_dtype=jnp.bfloat16):
    xf = x.astype(compute_dtype).astype(jnp.float32)
    wbf = wb.astype(compute_dtype).astype(jnp.float32)
    whf = wh.astype(compute_dtype).astype(jnp.float32)
    feat = jnp.maximum(xf @ wbf + bb, 0.0)
    feat_b = feat.astype(compute_dtype).astype(jnp.float32)
    return [feat_b @ whf[h] + bh[h] for h in range(wh.shape[0])]


if __name__ == "__main__":
    # Shapes consistent with the module:
    #   batch=8, backbone input d_in=32, in_features=32, out_features=16, n_heads=3
    B, D_IN, IN_F, OUT_F, N_HEADS = 8, 32, 32, 16, 3

    key = jax.random.PRNGKey(0)
    kx, kwb, kbb, kwh, kbh, kx2 = jax.random.split(key, 6)

    x = jax.random.normal(kx, (B, D_IN), dtype=jnp.float32)
    # Backbone (the wrapped `module`): Linear(d_in, in_features) + ReLU.
    wb = jax.random.normal(kwb, (D_IN, IN_F), dtype=jnp.float32) * 0.1
    bb = jax.random.normal(kbb, (IN_F,), dtype=jnp.float32) * 0.1
    # Heads: n_heads x Linear(in_features, out_features), stored as (H, F, O).
    wh = jax.random.normal(kwh, (N_HEADS, IN_F, OUT_F), dtype=jnp.float32) * 0.1
    bh = jax.random.normal(kbh, (N_HEADS, OUT_F), dtype=jnp.float32) * 0.1

    # --- 1) demo shape, forcing the Pallas path so the kernel is exercised ---
    outs = multihead_forward(x, wb, bb, wh, bh, impl="pallas")
    outs = [jax.block_until_ready(o) for o in outs]
    refs = _reference(x, wb, bb, wh, bh)
    for o, r in zip(outs, refs):
        assert o.shape == (B, OUT_F)
        err = float(jnp.max(jnp.abs(o - r)))
        assert err < 2e-2, f"max abs err {err}"

    # --- 2) ragged batch: exercises the padded last tile + lane-padded output ---
    B2 = 100
    x2 = jax.random.normal(kx2, (B2, D_IN), dtype=jnp.float32)
    outs2 = multihead_forward(x2, wb, bb, wh, bh, impl="pallas")
    outs2 = [jax.block_until_ready(o) for o in outs2]
    refs2 = _reference(x2, wb, bb, wh, bh)
    for o, r in zip(outs2, refs2):
        assert o.shape == (B2, OUT_F)
        err = float(jnp.max(jnp.abs(o - r)))
        assert err < 2e-2, f"max abs err {err}"

    print("KERNEL_OK")
</pallas_src>

<mosaic_0001>
module attributes {stable_mosaic.version = 11 : i64} {
  func.func @_multihead_kernel(%arg0: i32, %arg1: memref<8x32xbf16, #tpu.memory_space<vmem>>, %arg2: memref<32x32xbf16, #tpu.memory_space<vmem>>, %arg3: memref<1x32xf32, #tpu.memory_space<vmem>>, %arg4: memref<32x128xbf16, #tpu.memory_space<vmem>>, %arg5: memref<1x128xf32, #tpu.memory_space<vmem>>, %arg6: memref<8x128xf32, #tpu.memory_space<vmem>>) attributes {dimension_semantics = [#tpu.dimension_semantics<parallel>], iteration_bounds = array<i64: 1>, scalar_prefetch = 0 : i64, scratch_operands = 0 : i64, tpu.core_type = #tpu.core_type<tc>, window_params = [{transform_indices = @transform_0, window_bounds = array<i64: 8, 32>}, {pipeline_mode = #tpu.pipeline_mode<synchronous>, transform_indices = @transform_1, window_bounds = array<i64: 32, 32>}, {pipeline_mode = #tpu.pipeline_mode<synchronous>, transform_indices = @transform_2, window_bounds = array<i64: 1, 32>}, {pipeline_mode = #tpu.pipeline_mode<synchronous>, transform_indices = @transform_3, window_bounds = array<i64: 32, 128>}, {pipeline_mode = #tpu.pipeline_mode<synchronous>, transform_indices = @transform_4, window_bounds = array<i64: 1, 128>}, {transform_indices = @transform_5, window_bounds = array<i64: 8, 128>}]} {
    %c0 = arith.constant 0 : index
    %c0_0 = arith.constant 0 : index
    %0 = vector.load %arg1[%c0, %c0_0] : memref<8x32xbf16, #tpu.memory_space<vmem>>, vector<8x32xbf16>
    %c0_1 = arith.constant 0 : index
    %c0_2 = arith.constant 0 : index
    %1 = vector.load %arg2[%c0_1, %c0_2] : memref<32x32xbf16, #tpu.memory_space<vmem>>, vector<32x32xbf16>
    %cst = arith.constant dense<0.000000e+00> : vector<8x32xf32>
    %2 = tpu.matmul %0, %1, %cst {dimension_numbers = #tpu.dot_dimension_numbers<[1], [0], [0], [1], [0, 0, 1, 1], [], []>} : vector<8x32xbf16>, vector<32x32xbf16>, vector<8x32xf32> -> vector<8x32xf32>
    %c0_3 = arith.constant 0 : index
    %c0_4 = arith.constant 0 : index
    %3 = vector.load %arg3[%c0_3, %c0_4] : memref<1x32xf32, #tpu.memory_space<vmem>>, vector<1x32xf32>
    %4 = vector.broadcast %3 : vector<1x32xf32> to vector<8x32xf32>
    %5 = arith.addf %2, %4 : vector<8x32xf32>
    %cst_5 = arith.constant 0.000000e+00 : f32
    %6 = vector.broadcast %cst_5 : f32 to vector<8x32xf32>
    %7 = arith.maximumf %5, %6 : vector<8x32xf32>
    %8 = arith.truncf %7 : vector<8x32xf32> to vector<8x32xbf16>
    %c0_6 = arith.constant 0 : index
    %c0_7 = arith.constant 0 : index
    %9 = vector.load %arg4[%c0_6, %c0_7] : memref<32x128xbf16, #tpu.memory_space<vmem>>, vector<32x128xbf16>
    %cst_8 = arith.constant dense<0.000000e+00> : vector<8x128xf32>
    %10 = tpu.matmul %8, %9, %cst_8 {dimension_numbers = #tpu.dot_dimension_numbers<[1], [0], [0], [1], [0, 0, 1, 1], [], []>} : vector<8x32xbf16>, vector<32x128xbf16>, vector<8x128xf32> -> vector<8x128xf32>
    %c0_9 = arith.constant 0 : index
    %c0_10 = arith.constant 0 : index
    %11 = vector.load %arg5[%c0_9, %c0_10] : memref<1x128xf32, #tpu.memory_space<vmem>>, vector<1x128xf32>
    %12 = vector.broadcast %11 : vector<1x128xf32> to vector<8x128xf32>
    %13 = arith.addf %10, %12 : vector<8x128xf32>
    %c0_11 = arith.constant 0 : index
    %c0_12 = arith.constant 0 : index
    %14 = vector.load %arg6[%c0_11, %c0_12] : memref<8x128xf32, #tpu.memory_space<vmem>>, vector<8x128xf32>
    tpu.vector_store %arg6[%c0_11, %c0_12], %13 {strides = array<i32>} : memref<8x128xf32, #tpu.memory_space<vmem>>, vector<8x128xf32>,
    return
  }
  func.func @transform_0(%arg0: i32) -> (i32, i32) {
    %c0_i32 = arith.constant 0 : i32
    %c0_i32_0 = arith.constant 0 : i32
    return %arg0, %c0_i32 : i32, i32
  }
  func.func @transform_1(%arg0: i32) -> (i32, i32) {
    %c0_i32 = arith.constant 0 : i32
    %c0_i32_0 = arith.constant 0 : i32
    %c0_i32_1 = arith.constant 0 : i32
    return %c0_i32, %c0_i32_0 : i32, i32
  }
  func.func @transform_2(%arg0: i32) -> (i32, i32) {
    %c0_i32 = arith.constant 0 : i32
    %c0_i32_0 = arith.constant 0 : i32
    %c0_i32_1 = arith.constant 0 : i32
    return %c0_i32, %c0_i32_0 : i32, i32
  }
  func.func @transform_3(%arg0: i32) -> (i32, i32) {
    %c0_i32 = arith.constant 0 : i32
    %c0_i32_0 = arith.constant 0 : i32
    %c0_i32_1 = arith.constant 0 : i32
    return %c0_i32, %c0_i32_0 : i32, i32
  }
  func.func @transform_4(%arg0: i32) -> (i32, i32) {
    %c0_i32 = arith.constant 0 : i32
    %c0_i32_0 = arith.constant 0 : i32
    %c0_i32_1 = arith.constant 0 : i32
    return %c0_i32, %c0_i32_0 : i32, i32
  }
  func.func @transform_5(%arg0: i32) -> (i32, i32) {
    %c0_i32 = arith.constant 0 : i32
    %c0_i32_0 = arith.constant 0 : i32
    return %arg0, %c0_i32 : i32, i32
  }
}

</mosaic_0001>

<llo_original>
// kernel: multihead_forward.1
$region0: #{multihead_forward.1}
  #allocation0 [shape = 'u32[]', space=smem, size = 0x4, offset = 0x4, fixed_abs, tag = 'smem constant byte address 0x4 - core index']
  #allocation1 [shape = 'u32[144,128]{1,0:T(1,128)}', space=vmem, size = 0x12000, scoped, tag = 'internal scratch']
  %s0 = inlined_call_operand.vmem [shape: bf16[8,32], index: 0, kind: input, shape index: {}]
  %s1 = inlined_call_operand.vmem [shape: bf16[32,32], index: 1, kind: input, shape index: {}]
  %s2 = inlined_call_operand.vmem [shape: f32[1,32], index: 2, kind: input, shape index: {}]
  %s3 = inlined_call_operand.vmem [shape: bf16[32,128], index: 3, kind: input, shape index: {}]
  %s4 = inlined_call_operand.vmem [shape: f32[1,128], index: 4, kind: input, shape index: {}]
  %s5 = inlined_call_operand.vmem [shape: f32[8,128], index: 5, kind: output, shape index: {}]
  %s6 = sld [smem:[#allocation0]]
  $region30: #{multihead_forward.1} parent=0
    _
  %s8 = ssub.s32 1, %s6
  %s9 = scalar_select 0, %s8, %s6
  // Predicated region
  $region2: #{multihead_forward.1} parent=0 // pred_check
    _
  $region3: #{multihead_forward.1} parent=0 // pred_check_branch
    %11 = sbr.rel (0) target = $region5
  $region4: #{multihead_forward.1} parent=0 // pred_region
    _
  $region5: #{multihead_forward.1} parent=0 // pred_fallthru
    _
  // Predicated region
  $region6: #{multihead_forward.1} parent=0 // pred_check
    _
  $region7: #{multihead_forward.1} parent=0 // pred_check_branch
    %13 = sbr.rel (0) target = $region9
  $region8: #{multihead_forward.1} parent=0 // pred_region
    _
  $region9: #{multihead_forward.1} parent=0 // pred_fallthru
    _
  // Predicated region
  $region10: #{multihead_forward.1} parent=0 // pred_check
    _
  $region11: #{multihead_forward.1} parent=0 // pred_check_branch
    %15 = sbr.rel (0) target = $region13
  $region12: #{multihead_forward.1} parent=0 // pred_region
    _
  $region13: #{multihead_forward.1} parent=0 // pred_fallthru
    _
  // Predicated region
  $region14: #{multihead_forward.1} parent=0 // pred_check
    _
  $region15: #{multihead_forward.1} parent=0 // pred_check_branch
    %17 = sbr.rel (0) target = $region17
  $region16: #{multihead_forward.1} parent=0 // pred_region
    _
  $region17: #{multihead_forward.1} parent=0 // pred_fallthru
    _
  // Predicated region
  $region18: #{multihead_forward.1} parent=0 // pred_check
    _
  $region19: #{multihead_forward.1} parent=0 // pred_check_branch
    %19 = sbr.rel (0) target = $region21
  $region20: #{multihead_forward.1} parent=0 // pred_region
    _
  $region21: #{multihead_forward.1} parent=0 // pred_fallthru
    _
  %v21 = vld [vmem:[%s0] sm:$0xf]
  %v22 = vld [vmem:[%s1] sm:$0xf]
  %v23 = vld [vmem:[%s1 + $0x4] sm:$0xf]
  %v24 = vld [vmem:[%s1 + $0x8] sm:$0xf]
  %v25 = vld [vmem:[%s1 + $0xc] sm:$0xf]
  %v26 = vld [vmem:[%s2] sm:$0x1]
  %v28 = vlaneseq
  %v29 = vshrl.u32 %v28, 7
  %v30 = vsub.s32 0, %v29
  %v31 = vrot.slane %v26, %v30
  %v37 = vunpack.c.l.b16 %v22
  %v38 = vunpack.c.l.b16 %v23
  %v39 = vunpack.c.l.b16 %v24
  %v40 = vunpack.c.l.b16 %v25
  %v41 = vpack.c.b16 %v38, %v37
  %v42 = vpack.c.b16 %v40, %v39
  %vm45 = vcmask 261120
  %v47 = vsel %vm45, %v21, 0
  %49 = vmatprep.subr.bf16.mxu0 0
  %50 = vmatpush1.bf16.msra.mxu0 %v41
  %51 = vmatprep.subr.bf16.mxu0 0
  %52 = vmatpush1.bf16.msra.mxu0 %v42
  %53 = vmatprep.subr.bf16.mxu0 0
  %54 = vmatpush1.bf16.msra.mxu0 0
  %55 = vmatprep.subr.bf16.mxu0 0
  %56 = vmatpush1.bf16.msra.mxu0 0
  %57 = vmatprep.subr.bf16.mxu0 0
  %58 = vmatpush1.bf16.msra.mxu0 0
  %59 = vmatprep.subr.bf16.mxu0 0
  %60 = vmatpush1.bf16.msra.mxu0 0
  %61 = vmatprep.subr.bf16.mxu0 0
  %62 = vmatpush1.bf16.msra.mxu0 0
  %63 = vmatprep.subr.bf16.mxu0 0
  %64 = vmatpush1.bf16.msra.mxu0 0
  %65 = vmatprep.subr.bf16.mxu0 0
  %66 = vmatpush1.bf16.msra.mxu0 0
  %67 = vmatprep.subr.bf16.mxu0 0
  %68 = vmatpush1.bf16.msra.mxu0 0
  %69 = vmatprep.subr.bf16.mxu0 0
  %70 = vmatpush1.bf16.msra.mxu0 0
  %71 = vmatprep.subr.bf16.mxu0 0
  %72 = vmatpush1.bf16.msra.mxu0 0
  %73 = vmatprep.subr.bf16.mxu0 0
  %74 = vmatpush1.bf16.msra.mxu0 0
  %75 = vmatprep.subr.bf16.mxu0 0
  %76 = vmatpush1.bf16.msra.mxu0 0
  %77 = vmatprep.subr.bf16.mxu0 0
  %78 = vmatpush1.bf16.msra.mxu0 0
  %79 = vmatprep.subr.bf16.mxu0 0
  %80 = vmatpush1.bf16.msra.mxu0 0
  %81 = vmatprep.mubr.bf16.mxu0 0
  %82 = vmatmul.mubr.bf16.gmra.mrb[0].mxu0 %v47
  %v83 = vpop.f32.mrb[0].mxu0
  %v84 = vadd.f32 %v31, %v83
  %v85 = vpop.f32.mrb[0].mxu0
  %v86 = vpop.f32.mrb[0].mxu0
  %v87 = vpop.f32.mrb[0].mxu0
  %88 = vdwg.mxu0
  %v89 = vmax.f32 %v84, 0.0
  %v90 = vpack.c.bf16 %v89, %v89
  %v91 = vld [vmem:[%s3] sm:$0xf]
  %v92 = vld [vmem:[%s3 + $0x4] sm:$0xf]
  %v93 = vld [vmem:[%s3 + $0x8] sm:$0xf]
  %v94 = vld [vmem:[%s3 + $0xc] sm:$0xf]
  %v95 = vld [vmem:[%s4] sm:$0x1]
  %v97 = vlaneseq
  %v98 = vshrl.u32 %v97, 7
  %v99 = vsub.s32 0, %v98
  %v100 = vrot.slane %v95, %v99
  %v106 = vunpack.c.l.b16 %v91
  %v107 = vunpack.c.l.b16 %v92
  %v108 = vunpack.c.l.b16 %v93
  %v109 = vunpack.c.l.b16 %v94
  %v110 = vpack.c.b16 %v107, %v106
  %v111 = vpack.c.b16 %v109, %v108
  %v115 = vsel %vm45, %v90, 0
  %117 = vmatprep.subr.bf16.mxu0 0
  %118 = vmatpush1.bf16.msra.mxu0 %v110
  %119 = vmatprep.subr.bf16.mxu0 0
  %120 = vmatpush1.bf16.msra.mxu0 %v111
  %121 = vmatprep.subr.bf16.mxu0 0
  %122 = vmatpush1.bf16.msra.mxu0 0
  %123 = vmatprep.subr.bf16.mxu0 0
  %124 = vmatpush1.bf16.msra.mxu0 0
  %125 = vmatprep.subr.bf16.mxu0 0
  %126 = vmatpush1.bf16.msra.mxu0 0
  %127 = vmatprep.subr.bf16.mxu0 0
  %128 = vmatpush1.bf16.msra.mxu0 0
  %129 = vmatprep.subr.bf16.mxu0 0
  %130 = vmatpush1.bf16.msra.mxu0 0
  %131 = vmatprep.subr.bf16.mxu0 0
  %132 = vmatpush1.bf16.msra.mxu0 0
  %133 = vmatprep.subr.bf16.mxu0 0
  %134 = vmatpush1.bf16.msra.mxu0 0
  %135 = vmatprep.subr.bf16.mxu0 0
  %136 = vmatpush1.bf16.msra.mxu0 0
  %137 = vmatprep.subr.bf16.mxu0 0
  %138 = vmatpush1.bf16.msra.mxu0 0
  %139 = vmatprep.subr.bf16.mxu0 0
  %140 = vmatpush1.bf16.msra.mxu0 0
  %141 = vmatprep.subr.bf16.mxu0 0
  %142 = vmatpush1.bf16.msra.mxu0 0
  %143 = vmatprep.subr.bf16.mxu0 0
  %144 = vmatpush1.bf16.msra.mxu0 0
  %145 = vmatprep.subr.bf16.mxu0 0
  %146 = vmatpush1.bf16.msra.mxu0 0
  %147 = vmatprep.subr.bf16.mxu0 0
  %148 = vmatpush1.bf16.msra.mxu0 0
  %149 = vmatprep.mubr.bf16.mxu0 0
  %150 = vmatmul.mubr.bf16.gmra.mrb[0].mxu0 %v115
  %v151 = vpop.f32.mrb[0].mxu0
  %v152 = vadd.f32 %v100, %v151
  %v153 = vpop.f32.mrb[0].mxu0
  %v154 = vpop.f32.mrb[0].mxu0
  %v155 = vpop.f32.mrb[0].mxu0
  %156 = vdwg.mxu0
  %157 = vst [vmem:[%s5] sm:$0xff] %v152
  // Predicated region
  $region22: #{multihead_forward.1} parent=0 // pred_check
    _
  $region23: #{multihead_forward.1} parent=0 // pred_check_branch
    %159 = sbr.rel (0) target = $region25
  $region24: #{multihead_forward.1} parent=0 // pred_region
    _
  $region25: #{multihead_forward.1} parent=0 // pred_fallthru
    _
  // Predicated region
  $region26: #{multihead_forward.1} parent=0 // pred_check
    _
  $region27: #{multihead_forward.1} parent=0 // pred_check_branch
    %161 = sbr.rel (0) target = $region29
  $region28: #{multihead_forward.1} parent=0 // pred_region
    _
  $region29: #{multihead_forward.1} parent=0 // pred_fallthru
    _

</llo_original>
